<compile_context>
chip_gen: v7x
topology: tpu7x:2x2x1
jax: 0.10.0
libtpu: 0.0.40
codegen_flags: <defaults>
</compile_context>

<pallas_src>
import jax
import jax.numpy as jnp
from jax.experimental import pallas as pl
from jax.experimental.pallas import tpu as pltpu


def _slab_width(hidden_size):
    """Lane-dense state-slab width: [hid | mem | y-lanes], padded to 128 lanes."""
    return max(128, ((2 * hidden_size + 1 + 127) // 128) * 128)


# ---------------------------------------------------------------------------
# Shared per-step math (used by both the single-step and the sequence kernel).
# ---------------------------------------------------------------------------
def _lstm_step(xcol, h, mem, wh, wx, b, wout, bout):
    """xcol [B,1], h/mem [B,H], wh [H,4H], wx/b [1,4H], wout [1,H], bout [1,1]."""
    H = h.shape[1]
    # One fused MXU matmul for all four gates (hidden part), rank-1 VPU update
    # for the scalar input column, one packed bias add.
    pre = jnp.dot(h, wh, preferred_element_type=jnp.float32)      # [B, 4H]
    pre = pre + xcol * wx
    pre = pre + b
    # ONE sigmoid over the whole packed vreg, ONE tanh on the c slice
    # (halves the serial EUP chain vs. 4 per-gate transcendental passes).
    sig = jax.nn.sigmoid(pre)                                     # [B, 4H]
    c_sq = jnp.tanh(pre[:, 2 * H:3 * H])
    new_mem = sig[:, 0 * H:1 * H] * mem + sig[:, 1 * H:2 * H] * c_sq
    new_hid = sig[:, 3 * H:4 * H] * jnp.tanh(new_mem)
    # Output transform as VPU multiply + lane reduction (no N=1 MXU matmul).
    y = jnp.sum(new_hid * wout, axis=-1, keepdims=True) + bout    # [B, 1]
    return y, new_hid, new_mem


# ---------------------------------------------------------------------------
# Single-step kernel (module forward semantics).
# ---------------------------------------------------------------------------
def lstm_cell_kernel(state_ref, x_ref, wh_ref, wx_ref, b_ref, wout_ref, bout_ref,
                     slab_ref):
    H = wh_ref.shape[0]
    B = state_ref.shape[0]
    W = slab_ref.shape[1]

    state = state_ref[...]                       # [B, W]  (aliased with slab_ref)
    h = state[:, 0:H]
    mem = state[:, H:2 * H]
    xcol = x_ref[...]                            # [B, 1]

    y, new_hid, new_mem = _lstm_step(xcol, h, mem, wh_ref[...], wx_ref[...],
                                     b_ref[...], wout_ref[...], bout_ref[...])

    # One lane-dense full-vreg store: [hid | mem | y broadcast over tail lanes].
    y_lanes = jnp.broadcast_to(y, (B, W - 2 * H))
    slab_ref[...] = jnp.concatenate([new_hid, new_mem, y_lanes],
                                    axis=1).astype(slab_ref.dtype)


# ---------------------------------------------------------------------------
# Sequence kernel: T recurrent steps inside one pallas_call.
# ---------------------------------------------------------------------------
def lstm_seq_kernel(state_ref, x_ref, wh_ref, wx_ref, b_ref, wout_ref, bout_ref,
                    y_ref, final_ref):
    H = wh_ref.shape[0]
    B = state_ref.shape[0]
    T = x_ref.shape[0]
    W = final_ref.shape[1]

    # Hoist weight loads out of the loop (stay vreg/VMEM resident).
    wh = wh_ref[...]
    wx = wx_ref[...]
    b = b_ref[...]
    wout = wout_ref[...]
    bout = bout_ref[...]

    state0 = state_ref[...]

    def step(t, carry):
        h, mem = carry
        y, h, mem = _lstm_step(x_ref[t], h, mem, wh, wx, b, wout, bout)
        y_ref[t] = y.astype(y_ref.dtype)
        return (h, mem)

    h_f, c_f = jax.lax.fori_loop(0, T, step,
                                 (state0[:, 0:H], state0[:, H:2 * H]),
                                 unroll=True)

    pad = jnp.zeros((B, W - 2 * H), jnp.float32)
    final_ref[...] = jnp.concatenate([h_f, c_f, pad], axis=1).astype(final_ref.dtype)


# ---------------------------------------------------------------------------
# One-time parameter / state packing (outside the per-step hot path).
# ---------------------------------------------------------------------------
def pack_params(params, dtype=jnp.float32):
    """Pre-transpose PyTorch-layout Linear weights and fuse the four gate
    Linears into a [1+H, 4H] weight + [1, 4H] bias (order: f, i, c, o).
    Stored already in the kernel compute dtype. Call ONCE."""
    w_all = jnp.concatenate(
        [params["Wf_w"].T, params["Wi_w"].T, params["Wc_w"].T, params["Wo_w"].T],
        axis=1).astype(dtype)                         # [1+H, 4H]
    b_all = jnp.concatenate(
        [params["Wf_b"], params["Wi_b"], params["Wc_b"], params["Wo_b"]],
        axis=0)[None, :].astype(dtype)                # [1, 4H]
    return {
        "w_x": w_all[0:1, :],                         # [1, 4H] scalar-input row
        "w_h": w_all[1:, :],                          # [H, 4H] hidden part
        "b": b_all,                                   # [1, 4H]
        "w_out": params["out_w"].astype(dtype),       # [1, H]
        "b_out": params["out_b"][None, :].astype(dtype),  # [1, 1]
    }


def pack_state(hidden_tensor, memory_tensor):
    """Pack (hidden, memory) into one lane-dense [B, slab] f32 state slab."""
    B, H = hidden_tensor.shape
    W = _slab_width(H)
    pad = jnp.zeros((B, W - 2 * H), jnp.float32)
    return jnp.concatenate([hidden_tensor.astype(jnp.float32),
                            memory_tensor.astype(jnp.float32), pad], axis=1)


# ---------------------------------------------------------------------------
# Wrappers.
# ---------------------------------------------------------------------------
def lstm_cell_forward(input_tensor, hidden_tensor, memory_tensor, packed):
    """input: [B], hidden/memory: [B, H]. Returns (out [B,1], h [B,H], c [B,H])."""
    B = input_tensor.shape[0]
    H = hidden_tensor.shape[1]
    W = _slab_width(H)
    dtype = hidden_tensor.dtype

    state = pack_state(hidden_tensor, memory_tensor)   # in a scan, carry the slab
    vmem = pl.BlockSpec(memory_space=pltpu.VMEM)

    slab = pl.pallas_call(
        lstm_cell_kernel,
        out_shape=jax.ShapeDtypeStruct((B, W), jnp.float32),
        in_specs=[vmem] * 7,
        out_specs=vmem,
        input_output_aliases={0: 0},       # state slab updated in place
    )(state, input_tensor[:, None].astype(jnp.float32),
      packed["w_h"], packed["w_x"], packed["b"], packed["w_out"], packed["b_out"])

    out = slab[:, 2 * H:2 * H + 1].astype(dtype)
    hid = slab[:, 0:H].astype(dtype)
    mem = slab[:, H:2 * H].astype(dtype)
    return out, hid, mem


def lstm_sequence_forward(x_seq, hidden_tensor, memory_tensor, packed):
    """x_seq: [T, B]. Runs T recurrent steps inside ONE pallas_call.
    Returns (y_seq [T, B, 1], final_hidden [B, H], final_memory [B, H])."""
    T, B = x_seq.shape
    H = hidden_tensor.shape[1]
    W = _slab_width(H)
    dtype = hidden_tensor.dtype

    state = pack_state(hidden_tensor, memory_tensor)
    vmem = pl.BlockSpec(memory_space=pltpu.VMEM)

    y_seq, final = pl.pallas_call(
        lstm_seq_kernel,
        out_shape=(jax.ShapeDtypeStruct((T, B, 1), jnp.float32),
                   jax.ShapeDtypeStruct((B, W), jnp.float32)),
        in_specs=[vmem] * 7,
        out_specs=(vmem, vmem),
        input_output_aliases={0: 1},       # state slab -> final state slab
    )(state, x_seq[:, :, None].astype(jnp.float32),
      packed["w_h"], packed["w_x"], packed["b"], packed["w_out"], packed["b_out"])

    return (y_seq.astype(dtype),
            final[:, 0:H].astype(dtype),
            final[:, H:2 * H].astype(dtype))


# ---------------------------------------------------------------------------
# Init + pure-JAX reference (mirrors the PyTorch forward exactly).
# ---------------------------------------------------------------------------
def init_params(key, hidden_size, dtype=jnp.float32):
    in_dim = 1 + hidden_size
    keys = jax.random.split(key, 10)
    bound_gate = 1.0 / jnp.sqrt(jnp.array(in_dim, dtype=jnp.float32))
    bound_out = 1.0 / jnp.sqrt(jnp.array(hidden_size, dtype=jnp.float32))

    def u(k, shape, bound):
        return jax.random.uniform(k, shape, dtype, -bound, bound)

    return {
        "Wf_w": u(keys[0], (hidden_size, in_dim), bound_gate),
        "Wf_b": u(keys[1], (hidden_size,), bound_gate),
        "Wi_w": u(keys[2], (hidden_size, in_dim), bound_gate),
        "Wi_b": u(keys[3], (hidden_size,), bound_gate),
        "Wc_w": u(keys[4], (hidden_size, in_dim), bound_gate),
        "Wc_b": u(keys[5], (hidden_size,), bound_gate),
        "Wo_w": u(keys[6], (hidden_size, in_dim), bound_gate),
        "Wo_b": u(keys[7], (hidden_size,), bound_gate),
        "out_w": u(keys[8], (1, hidden_size), bound_out),
        "out_b": u(keys[9], (1,), bound_out),
    }


def reference_forward(input_tensor, hidden_tensor, memory_tensor, params):
    conc = jnp.concatenate([input_tensor[:, None], hidden_tensor], axis=1)
    lin = lambda w, b: conc @ params[w].T + params[b]
    F = jax.nn.sigmoid(lin("Wf_w", "Wf_b"))
    i = jax.nn.sigmoid(lin("Wi_w", "Wi_b"))
    c_sq = jnp.tanh(lin("Wc_w", "Wc_b"))
    o = jax.nn.sigmoid(lin("Wo_w", "Wo_b"))
    mem = F * memory_tensor + i * c_sq
    hid = o * jnp.tanh(mem)
    out = hid @ params["out_w"].T + params["out_b"]
    return out, hid, mem


if __name__ == "__main__":
    B, H, T = 8, 32, 8
    key = jax.random.PRNGKey(0)
    kp, kx, kh, kc, ks = jax.random.split(key, 5)

    params = init_params(kp, H)
    packed = pack_params(params)                       # pack once

    input_tensor = jax.random.normal(kx, (B,), jnp.float32)
    hidden_tensor = jax.random.normal(kh, (B, H), jnp.float32)
    memory_tensor = jax.random.normal(kc, (B, H), jnp.float32)

    # ---- single step (module semantics) ----
    out, hid, mem = lstm_cell_forward(input_tensor, hidden_tensor, memory_tensor, packed)
    jax.block_until_ready((out, hid, mem))

    r_out, r_hid, r_mem = reference_forward(input_tensor, hidden_tensor, memory_tensor, params)
    assert out.shape == (B, 1) and hid.shape == (B, H) and mem.shape == (B, H)
    assert jnp.allclose(out, r_out, atol=1e-5, rtol=1e-5)
    assert jnp.allclose(hid, r_hid, atol=1e-5, rtol=1e-5)
    assert jnp.allclose(mem, r_mem, atol=1e-5, rtol=1e-5)

    # ---- hoisted recurrence: T steps in one kernel, checked against a scan ----
    x_seq = jax.random.normal(ks, (T, B), jnp.float32)
    y_seq, h_f, c_f = lstm_sequence_forward(x_seq, hidden_tensor, memory_tensor, packed)
    jax.block_until_ready((y_seq, h_f, c_f))

    def ref_step(carry, x_t):
        h, c = carry
        o, h, c = reference_forward(x_t, h, c, params)
        return (h, c), o

    (rh_f, rc_f), r_y = jax.lax.scan(ref_step, (hidden_tensor, memory_tensor), x_seq)
    assert y_seq.shape == (T, B, 1)
    assert jnp.allclose(y_seq, r_y, atol=1e-4, rtol=1e-4)
    assert jnp.allclose(h_f, rh_f, atol=1e-4, rtol=1e-4)
    assert jnp.allclose(c_f, rc_f, atol=1e-4, rtol=1e-4)

    print("KERNEL_OK")
</pallas_src>

<mosaic_0001>
module attributes {stable_mosaic.version = 11 : i64} {
  func.func @lstm_cell_kernel(%arg0: memref<8x128xf32, #tpu.memory_space<vmem>>, %arg1: memref<8x1xf32, #tpu.memory_space<vmem>>, %arg2: memref<32x128xf32, #tpu.memory_space<vmem>>, %arg3: memref<1x128xf32, #tpu.memory_space<vmem>>, %arg4: memref<1x128xf32, #tpu.memory_space<vmem>>, %arg5: memref<1x32xf32, #tpu.memory_space<vmem>>, %arg6: memref<1x1xf32, #tpu.memory_space<vmem>>, %arg7: memref<8x128xf32, #tpu.memory_space<vmem>>) attributes {dimension_semantics = [], scalar_prefetch = 0 : i64, scratch_operands = 0 : i64, tpu.core_type = #tpu.core_type<tc>} {
    %c0 = arith.constant 0 : index
    %c0_0 = arith.constant 0 : index
    %0 = vector.load %arg0[%c0, %c0_0] : memref<8x128xf32, #tpu.memory_space<vmem>>, vector<8x128xf32>
    %1 = vector.extract_strided_slice %0 {offsets = [0, 0], sizes = [8, 32], strides = [1, 1]} : vector<8x128xf32> to vector<8x32xf32>
    %2 = vector.extract_strided_slice %0 {offsets = [0, 32], sizes = [8, 32], strides = [1, 1]} : vector<8x128xf32> to vector<8x32xf32>
    %c0_1 = arith.constant 0 : index
    %c0_2 = arith.constant 0 : index
    %3 = vector.load %arg1[%c0_1, %c0_2] : memref<8x1xf32, #tpu.memory_space<vmem>>, vector<8x1xf32>
    %c0_3 = arith.constant 0 : index
    %c0_4 = arith.constant 0 : index
    %4 = vector.load %arg2[%c0_3, %c0_4] : memref<32x128xf32, #tpu.memory_space<vmem>>, vector<32x128xf32>
    %c0_5 = arith.constant 0 : index
    %c0_6 = arith.constant 0 : index
    %5 = vector.load %arg3[%c0_5, %c0_6] : memref<1x128xf32, #tpu.memory_space<vmem>>, vector<1x128xf32>
    %c0_7 = arith.constant 0 : index
    %c0_8 = arith.constant 0 : index
    %6 = vector.load %arg4[%c0_7, %c0_8] : memref<1x128xf32, #tpu.memory_space<vmem>>, vector<1x128xf32>
    %c0_9 = arith.constant 0 : index
    %c0_10 = arith.constant 0 : index
    %7 = vector.load %arg5[%c0_9, %c0_10] : memref<1x32xf32, #tpu.memory_space<vmem>>, vector<1x32xf32>
    %c0_11 = arith.constant 0 : index
    %c0_12 = arith.constant 0 : index
    %8 = vector.load %arg6[%c0_11, %c0_12] : memref<1x1xf32, #tpu.memory_space<vmem>>, vector<1x1xf32>
    %cst = arith.constant dense<0.000000e+00> : vector<8x128xf32>
    %9 = tpu.matmul %1, %4, %cst {dimension_numbers = #tpu.dot_dimension_numbers<[1], [0], [0], [1], [0, 0, 1, 1], [], []>} : vector<8x32xf32>, vector<32x128xf32>, vector<8x128xf32> -> vector<8x128xf32>
    %10 = vector.broadcast %3 : vector<8x1xf32> to vector<8x128xf32>
    %11 = vector.broadcast %5 : vector<1x128xf32> to vector<8x128xf32>
    %12 = arith.mulf %10, %11 : vector<8x128xf32>
    %13 = arith.addf %9, %12 : vector<8x128xf32>
    %14 = vector.broadcast %6 : vector<1x128xf32> to vector<8x128xf32>
    %15 = arith.addf %13, %14 : vector<8x128xf32>
    %16 = arith.negf %15 : vector<8x128xf32>
    %17 = math.exp %16 : vector<8x128xf32>
    %cst_13 = arith.constant 1.000000e+00 : f32
    %18 = vector.broadcast %cst_13 : f32 to vector<8x128xf32>
    %19 = arith.addf %18, %17 : vector<8x128xf32>
    %20 = arith.divf %18, %19 : vector<8x128xf32>
    %21 = vector.extract_strided_slice %15 {offsets = [0, 64], sizes = [8, 32], strides = [1, 1]} : vector<8x128xf32> to vector<8x32xf32>
    %22 = math.tanh %21 : vector<8x32xf32>
    %23 = vector.extract_strided_slice %20 {offsets = [0, 0], sizes = [8, 32], strides = [1, 1]} : vector<8x128xf32> to vector<8x32xf32>
    %24 = arith.mulf %23, %2 : vector<8x32xf32>
    %25 = vector.extract_strided_slice %20 {offsets = [0, 32], sizes = [8, 32], strides = [1, 1]} : vector<8x128xf32> to vector<8x32xf32>
    %26 = arith.mulf %25, %22 : vector<8x32xf32>
    %27 = arith.addf %24, %26 : vector<8x32xf32>
    %28 = vector.extract_strided_slice %20 {offsets = [0, 96], sizes = [8, 32], strides = [1, 1]} : vector<8x128xf32> to vector<8x32xf32>
    %29 = math.tanh %27 : vector<8x32xf32>
    %30 = arith.mulf %28, %29 : vector<8x32xf32>
    %31 = vector.broadcast %7 : vector<1x32xf32> to vector<8x32xf32>
    %32 = arith.mulf %30, %31 : vector<8x32xf32>
    %cst_14 = arith.constant dense<0.000000e+00> : vector<8xf32>
    %33 = vector.multi_reduction <add>, %32, %cst_14 [1] : vector<8x32xf32> to vector<8xf32>
    %34 = vector.shape_cast %33 : vector<8xf32> to vector<8x1xf32>
    %35 = vector.broadcast %8 : vector<1x1xf32> to vector<8x1xf32>
    %36 = arith.addf %34, %35 : vector<8x1xf32>
    %37 = vector.shape_cast %36 : vector<8x1xf32> to vector<8x1xf32>
    %38 = vector.broadcast %37 : vector<8x1xf32> to vector<8x64xf32>
    %39 = tpu.concatenate %30, %27, %38 in 1 : vector<8x32xf32>, vector<8x32xf32>, vector<8x64xf32> -> vector<8x128xf32>
    %c0_15 = arith.constant 0 : index
    %c0_16 = arith.constant 0 : index
    %40 = vector.load %arg7[%c0_15, %c0_16] : memref<8x128xf32, #tpu.memory_space<vmem>>, vector<8x128xf32>
    tpu.vector_store %arg7[%c0_15, %c0_16], %39 {strides = array<i32>} : memref<8x128xf32, #tpu.memory_space<vmem>>, vector<8x128xf32>,
    return
  }
}

</mosaic_0001>

<llo_original>
// kernel: tpu_custom_call.1
$region0: #{tpu_custom_call.1}
  #allocation0 [shape = 'u32[]', space=smem, size = 0x4, offset = 0x4, fixed_abs, tag = 'smem constant byte address 0x4 - core index']
  #allocation1 [shape = 'u32[144,128]{1,0:T(1,128)}', space=vmem, size = 0x12000, scoped, tag = 'internal scratch']
  #allocation2 [shape = 'f32[1,1]{1,0:T(1,128)S(1)}', space=vmem, size = 0x200, scoped, tag = 'scoped memory for tpu_custom_call.1']
  %s0 = inlined_call_operand.hbm [shape: f32[8,128], index: 0, kind: input, shape index: {}, may-alias: {0,7}]
  %s1 = inlined_call_operand.vmem [shape: f32[8,1], index: 1, kind: input, shape index: {}]
  %s2 = inlined_call_operand.vmem [shape: f32[32,128], index: 2, kind: input, shape index: {}]
  %s3 = inlined_call_operand.vmem [shape: f32[1,128], index: 3, kind: input, shape index: {}]
  %s4 = inlined_call_operand.vmem [shape: f32[1,128], index: 4, kind: input, shape index: {}]
  %s5 = inlined_call_operand.vmem [shape: f32[1,32], index: 5, kind: input, shape index: {}]
  %s6 = inlined_call_operand.<no memory space> [shape: f32[1,1], index: 6, kind: input, shape index: {}]
  %s7 = inlined_call_operand.hbm [shape: f32[8,128], index: 7, kind: output, shape index: {}, may-alias: {0,7}]
  %s8 = sld [smem:[#allocation0]]
  $region42: #{tpu_custom_call.1} parent=0
    _
  %s10 = ssub.s32 1, %s8
  %s11 = scalar_select 0, %s10, %s8
  %v12 = vstv %s6
  %13 = vst [vmem:[#allocation2] sm:$0x1] %v12
  $region1: #{tpu_custom_call.1} parent=0
    #allocation3 [shape = 'u8[4096]{0}', space=vmem, size = 0x1000, scoped, tag = 'input window, operand 0, single buffered']
    #allocation4 [shape = 's32[1]{0}', space=sflag, size = 0x4, scoped, tag = 'scoped memory for tpu_custom_call.1']
    #allocation5 [shape = 's32[1]{0}', space=sflag, size = 0x4, scoped, tag = 'scoped memory for tpu_custom_call.1']
    #allocation6 [shape = 'u8[4096]{0}', space=vmem, size = 0x1000, scoped, tag = 'output window, operand 0, single buffered']
    %14 = vsyncpa [#allocation4], 0
    %15 = vsyncpa [#allocation5], 0
    // Predicated region
    $region2: #{tpu_custom_call.1} parent=1 // pred_check
      _
    $region3: #{tpu_custom_call.1} parent=1 // pred_check_branch
      %17 = sbr.rel (0) target = $region5
    $region4: #{tpu_custom_call.1} parent=1 // pred_region
      %s19 = ssub.s32 128, 128
      %20 = vsyncadd [#allocation4], %s19
      %s22 = sshll.u32 [#allocation3], 4
      %s23 = int_to_ptr.vmem [resolvable:$true] %s22
      %25 = dma.hbm_to_vmem [thread:$0]  %s0, 128, %s23, [#allocation4]
    $region5: #{tpu_custom_call.1} parent=1 // pred_fallthru
      _
    // Predicated region
    $region6: #{tpu_custom_call.1} parent=1 // pred_check
      _
    $region7: #{tpu_custom_call.1} parent=1 // pred_check_branch
      %27 = sbr.rel (0) target = $region9
    $region8: #{tpu_custom_call.1} parent=1 // pred_region
      _
    $region9: #{tpu_custom_call.1} parent=1 // pred_fallthru
      _
    // Predicated region
    $region10: #{tpu_custom_call.1} parent=1 // pred_check
      _
    $region11: #{tpu_custom_call.1} parent=1 // pred_check_branch
      %29 = sbr.rel (0) target = $region13
    $region12: #{tpu_custom_call.1} parent=1 // pred_region
      _
    $region13: #{tpu_custom_call.1} parent=1 // pred_fallthru
      _
    // Predicated region
    $region14: #{tpu_custom_call.1} parent=1 // pred_check
      _
    $region15: #{tpu_custom_call.1} parent=1 // pred_check_branch
      %31 = sbr.rel (0) target = $region17
    $region16: #{tpu_custom_call.1} parent=1 // pred_region
      _
    $region17: #{tpu_custom_call.1} parent=1 // pred_fallthru
      _
    // Predicated region
    $region18: #{tpu_custom_call.1} parent=1 // pred_check
      _
    $region19: #{tpu_custom_call.1} parent=1 // pred_check_branch
      %33 = sbr.rel (0) target = $region21
    $region20: #{tpu_custom_call.1} parent=1 // pred_region
      _
    $region21: #{tpu_custom_call.1} parent=1 // pred_fallthru
      _
    // Predicated region
    $region22: #{tpu_custom_call.1} parent=1 // pred_check
      _
    $region23: #{tpu_custom_call.1} parent=1 // pred_check_branch
      %35 = sbr.rel (0) target = $region25
    $region24: #{tpu_custom_call.1} parent=1 // pred_region
      _
    $region25: #{tpu_custom_call.1} parent=1 // pred_fallthru
      _
    // Predicated region
    $region26: #{tpu_custom_call.1} parent=1 // pred_check
      _
    $region27: #{tpu_custom_call.1} parent=1 // pred_check_branch
      %37 = sbr.rel (0) target = $region29
    $region28: #{tpu_custom_call.1} parent=1 // pred_region
      _
    $region29: #{tpu_custom_call.1} parent=1 // pred_fallthru
      _
    // Predicated region
    $region30: #{tpu_custom_call.1} parent=1 // pred_check
      _
    $region31: #{tpu_custom_call.1} parent=1 // pred_check_branch
      %39 = sbr.rel (0) target = $region33
    $region32: #{tpu_custom_call.1} parent=1 // pred_region
      %40 = dma.done [#allocation4], 128
    $region33: #{tpu_custom_call.1} parent=1 // pred_fallthru
      _
    %v41 = vld [vmem:[#allocation3] sm:$0xff]
    %v42 = vld [vmem:[%s1] sm:$0xff]
    %v43 = vld [vmem:[%s2] sm:$0xff]
    %v44 = vld [vmem:[%s2 + $0x8] sm:$0xff]
    %v45 = vld [vmem:[%s2 + $0x10] sm:$0xff]
    %v46 = vld [vmem:[%s2 + $0x18] sm:$0xff]
    %v47 = vld [vmem:[%s3] sm:$0x1]
    %v48 = vld [vmem:[%s4] sm:$0x1]
    %v49 = vld [vmem:[%s5] sm:$0x1]
    %v50 = vld [vmem:[#allocation2] sm:$0x1]
    %52 = vset.pattern.permute.xlu0 0
    %53 = vperm.xlu0 %52, %v42
    %v54 = vpop.permute.xlu0 %53
    %v57 = vlaneseq
    %v58 = vshrl.u32 %v57, 7
    %v59 = vsub.s32 0, %v58
    %v60 = vrot.slane %v47, %v59
    %v62 = vmul.f32 %v54, %v60
    %vm63 = vcmask 261120
    %v65 = vsel %vm63, %v41, 0
    %67 = vmatprep.subr.mxu0 0.0
    %68 = vmatpush1.msra.mxu0 %v43
    %69 = vmatprep.subr.mxu0 0.0
    %70 = vmatpush1.msra.mxu0 %v44
    %71 = vmatprep.subr.mxu0 0.0
    %72 = vmatpush1.msra.mxu0 %v45
    %73 = vmatprep.subr.mxu0 0.0
    %74 = vmatpush1.msra.mxu0 %v46
    %75 = vmatprep.subr.mxu0 0.0
    %76 = vmatpush1.msra.mxu0 0.0
    %77 = vmatprep.subr.mxu0 0.0
    %78 = vmatpush1.msra.mxu0 0.0
    %79 = vmatprep.subr.mxu0 0.0
    %80 = vmatpush1.msra.mxu0 0.0
    %81 = vmatprep.subr.mxu0 0.0
    %82 = vmatpush1.msra.mxu0 0.0
    %83 = vmatprep.subr.mxu0 0.0
    %84 = vmatpush1.msra.mxu0 0.0
    %85 = vmatprep.subr.mxu0 0.0
    %86 = vmatpush1.msra.mxu0 0.0
    %87 = vmatprep.subr.mxu0 0.0
    %88 = vmatpush1.msra.mxu0 0.0
    %89 = vmatprep.subr.mxu0 0.0
    %90 = vmatpush1.msra.mxu0 0.0
    %91 = vmatprep.subr.mxu0 0.0
    %92 = vmatpush1.msra.mxu0 0.0
    %93 = vmatprep.subr.mxu0 0.0
    %94 = vmatpush1.msra.mxu0 0.0
    %95 = vmatprep.subr.mxu0 0.0
    %96 = vmatpush1.msra.mxu0 0.0
    %97 = vmatprep.subr.mxu0 0.0
    %98 = vmatpush1.msra.mxu0 0.0
    %99 = vmatprep.subr.mxu0 0.0
    %100 = vmatpush1.msra.mxu0 0.0
    %101 = vmatprep.subr.mxu0 0.0
    %102 = vmatpush1.msra.mxu0 0.0
    %103 = vmatprep.subr.mxu0 0.0
    %104 = vmatpush1.msra.mxu0 0.0
    %105 = vmatprep.subr.mxu0 0.0
    %106 = vmatpush1.msra.mxu0 0.0
    %107 = vmatprep.subr.mxu0 0.0
    %108 = vmatpush1.msra.mxu0 0.0
    %109 = vmatprep.subr.mxu0 0.0
    %110 = vmatpush1.msra.mxu0 0.0
    %111 = vmatprep.subr.mxu0 0.0
    %112 = vmatpush1.msra.mxu0 0.0
    %113 = vmatprep.subr.mxu0 0.0
    %114 = vmatpush1.msra.mxu0 0.0
    %115 = vmatprep.subr.mxu0 0.0
    %116 = vmatpush1.msra.mxu0 0.0
    %117 = vmatprep.subr.mxu0 0.0
    %118 = vmatpush1.msra.mxu0 0.0
    %119 = vmatprep.subr.mxu0 0.0
    %120 = vmatpush1.msra.mxu0 0.0
    %121 = vmatprep.subr.mxu0 0.0
    %122 = vmatpush1.msra.mxu0 0.0
    %123 = vmatprep.subr.mxu0 0.0
    %124 = vmatpush1.msra.mxu0 0.0
    %125 = vmatprep.subr.mxu0 0.0
    %126 = vmatpush1.msra.mxu0 0.0
    %127 = vmatprep.subr.mxu0 0.0
    %128 = vmatpush1.msra.mxu0 0.0
    %129 = vmatprep.subr.mxu0 0.0
    %130 = vmatpush1.msra.mxu0 0.0
    %131 = vmatprep.mubr.f32.mxu0 0.0
    %132 = vmatmul.mubr.f32.gmra.mrb[0].mxu0 %v65
    %v133 = vpop.f32.mrb[0].mxu0
    %v134 = vadd.f32 %v62, %v133
    %v135 = vpop.f32.mrb[0].mxu0
    %136 = vdwg.mxu0
    %v138 = vlaneseq
    %v139 = vshrl.u32 %v138, 7
    %v140 = vsub.s32 0, %v139
    %v141 = vrot.slane %v48, %v140
    %v143 = vadd.f32 %v134, %v141
    %v144 = vxor.u32 %v143, 2147483648
    %v145 = vmul.f32 %v144, 1.442695
    %v146 = vpow.pop %v145
    %v147 = vadd.f32 %v146, 1.0
    %v148 = vrcp.pop %v147
    %v149 = vmul.f32 1.0, %v148
    %v150 = vtanh.pop %v143
    %151 = vrot.lane.b32.xlu0 %v41, 96
    %v152 = vpop.permute.xlu0 %151
    %v154 = vmul.f32 %v149, %v152
    %156 = vrot.lane.b32.xlu0 %v150, 96
    %v157 = vpop.permute.xlu0 %156
    %v159 = vmul.f32 %v149, %v157
    %161 = vrot.lane.b32.xlu0 %v159, 96
    %v162 = vpop.permute.xlu0 %161
    %v164 = vadd.f32 %v154, %v162
    %v165 = vtanh.pop %v164
    %167 = vrot.lane.b32.xlu0 %v165, 96
    %v168 = vpop.permute.xlu0 %167
    %v170 = vmul.f32 %v149, %v168
    %v172 = vlaneseq
    %v173 = vshrl.u32 %v172, 7
    %v174 = vsub.s32 0, %v173
    %v175 = vrot.slane %v49, %v174
    %176 = vrot.lane.b32.xlu0 %v175, 96
    %v177 = vpop.permute.xlu0 %176
    %v179 = vmul.f32 %v170, %v177
    %181 = vrot.lane.b32.xlu0 %v179, 32
    %v182 = vpop.permute.xlu0 %181
    %v184 = vsel %vm63, %v182, 0.0
    %185 = vadd.xlane.f32.xlu0 %v184
    %v186 = vpop.xlane.xlu0 %185
    %v188 = vlaneseq
    %v189 = vshrl.u32 %v188, 7
    %v190 = vsub.s32 0, %v189
    %v191 = vrot.slane %v50, %v190
    %v193 = vadd.f32 %v186, %v191
    %195 = vset.pattern.permute.xlu0 0
    %196 = vperm.xlu0 %195, %v193
    %v197 = vpop.permute.xlu0 %196
    %200 = vrot.lane.b32.xlu0 %v170, 32
    %v201 = vpop.permute.xlu0 %200
    %204 = vrot.lane.b32.xlu0 %v164, 32
    %v205 = vpop.permute.xlu0 %204
    %v207 = vsel %vm63, %v201, %v205
    %vm208 = vcmask 523264
    %v209 = vsel %vm208, %v207, %v197
    %210 = vst [vmem:[#allocation6] sm:$0xff] %v209
    // Predicated region
    $region34: #{tpu_custom_call.1} parent=1 // pred_check
      _
    $region35: #{tpu_custom_call.1} parent=1 // pred_check_branch
      %212 = sbr.rel (0) target = $region37
    $region36: #{tpu_custom_call.1} parent=1 // pred_region
      %s214 = ssub.s32 128, 128
      %215 = vsyncadd [#allocation5], %s214
      %s217 = sshll.u32 [#allocation6], 4
      %s218 = int_to_ptr.vmem [resolvable:$true] %s217
      %220 = dma.vmem_to_hbm [thread:$0]  %s218, 128, %s7, [#allocation5]
    $region37: #{tpu_custom_call.1} parent=1 // pred_fallthru
      _
    // Predicated region
    $region38: #{tpu_custom_call.1} parent=1 // pred_check
      _
    $region39: #{tpu_custom_call.1} parent=1 // pred_check_branch
      %222 = sbr.rel (0) target = $region41
    $region40: #{tpu_custom_call.1} parent=1 // pred_region
      %223 = dma.done [#allocation5], 128
    $region41: #{tpu_custom_call.1} parent=1 // pred_fallthru
      _
    %224 = vsyncpa [#allocation4], 1
    %225 = vsyncpa [#allocation5], 1

</llo_original>
